<compile_context>
chip_gen: v7x
topology: tpu7x:2x2x1
jax: 0.10.0
libtpu: 0.0.40
codegen_flags: <defaults>
</compile_context>

<pallas_src>
import numpy as np
import jax
import jax.numpy as jnp
from jax import lax
from jax.experimental import pallas as pl
from jax.experimental.pallas import tpu as pltpu


# ---------------------------------------------------------------------------
# Fused MHSA kernel factory.  Per (batch n, head-group g) grid step:
#   qkv      = x @ Wqkv[g] + bqkv[g]          (one wide matmul; q-scale folded)
#   per head i in group: p_i = exp(q_i k_i^T - rowmax)   (unnormalized)
#                        h_i = (p_i @ v_i) * 1/rowsum(p_i)
#   o_ref   += concat_i(h_i) @ Wo[g]          (lane-dense (M, E) accumulate)
# with o_ref initialized to the projection bias on g == 0.
# ---------------------------------------------------------------------------
def _make_kernel(heads_per_group, head_dim, seq_len, m_pad, emb_size, matmul_dtype):
    G, d, E = heads_per_group, head_dim, emb_size
    gd = G * d

    def cast(a):
        return a if matmul_dtype is None else a.astype(matmul_dtype)

    def kernel(x_ref, wqkv_ref, bqkv_ref, wo_ref, bo_ref, o_ref):
        g = pl.program_id(1)

        # First head-group: init the resident output block with the proj bias.
        @pl.when(g == 0)
        def _():
            o_ref[0] = jnp.broadcast_to(bo_ref[...], (m_pad, E)).astype(o_ref.dtype)

        x = x_ref[0]                                                  # (m_pad, C)

        # Fused QKV projection for the whole head group (one wide MXU matmul).
        qkv = jnp.dot(cast(x), cast(wqkv_ref[g]),
                      preferred_element_type=jnp.float32) + bqkv_ref[g]
        q = qkv[:, 0 * gd:1 * gd]                                     # scale folded
        k = qkv[:, 1 * gd:2 * gd]
        v = qkv[:, 2 * gd:3 * gd]

        head_outs = []
        for i in range(G):                                            # static, unrolled
            qi = q[:, i * d:(i + 1) * d]
            ki = k[:, i * d:(i + 1) * d]
            vi = v[:, i * d:(i + 1) * d]
            # q @ k^T without materializing a transposed copy of k.
            s = lax.dot_general(cast(qi), cast(ki),
                                dimension_numbers=(((1,), (1,)), ((), ())),
                                preferred_element_type=jnp.float32)   # (m_pad, m_pad)
            if m_pad != seq_len:                                      # mask padded keys
                col = lax.broadcasted_iota(jnp.int32, s.shape, 1)
                s = jnp.where(col < seq_len, s, jnp.float32(-1e30))
            s = s - jnp.max(s, axis=-1, keepdims=True)
            p = jnp.exp(s)                                            # unnormalized
            inv = pl.reciprocal(jnp.sum(p, axis=-1, keepdims=True), approx=True)
            # TODO(synk): training-mode attention dropout not implemented (eval identity).
            hv = jnp.dot(cast(p), cast(vi),
                         preferred_element_type=jnp.float32) * inv    # (m_pad, d)
            head_outs.append(hv)

        head_out = head_outs[0] if G == 1 else jnp.concatenate(head_outs, axis=-1)
        # Per-group slice of the output projection, accumulated into o_ref.
        o_ref[0] += jnp.dot(cast(head_out), cast(wo_ref[g]),
                            preferred_element_type=jnp.float32).astype(o_ref.dtype)

    return kernel


def multi_head_self_attention_forward(x, w_qkv, b_qkv, w_proj, b_proj,
                                      emb_size, num_heads, *,
                                      matmul_dtype=None, group_width=256):
    """x: (N, M, C) f32. w_qkv: (3*emb, C). w_proj: (emb, emb). Returns (N, M, emb).

    matmul_dtype=jnp.bfloat16 casts MXU operands (f32 accumulation) — recommended
    on v6e/v7x; the default (None) keeps exact f32 math.
    """
    N, M, C = x.shape
    E, H = emb_size, num_heads
    d = E // H
    assert H * d == E

    # Head grouping: largest divisor of H with group width G*d <= group_width.
    G = 1
    for cand in range(1, H + 1):
        if H % cand == 0 and cand * d <= max(group_width, d):
            G = cand
    n_groups = H // G
    gd = G * d

    # Pad sequence length to a full sublane multiple (padded keys masked in-kernel).
    m_pad = ((M + 7) // 8) * 8
    x_in = x if m_pad == M else jnp.pad(x, ((0, 0), (0, m_pad - M), (0, 0)))

    # ---- parameter prep (plain JAX glue, mirrors the PyTorch layout exactly) ---
    # qkv Linear output channels decompose as (h, d, o) with o in {q,k,v}
    # (rearrange 'n m (h d o) -> o n h m d'); query scale 1/sqrt(emb_size)
    # (as in the PyTorch module) is folded into wq / bq.
    scale = jnp.float32(E) ** 0.5
    w3 = w_qkv.reshape(H, d, 3, C)                                   # (H, d, 3, C)
    b3 = b_qkv.reshape(H, d, 3)                                      # (H, d, 3)
    wq = jnp.transpose(w3[:, :, 0, :], (2, 0, 1)) / scale            # (C, H, d)
    wk = jnp.transpose(w3[:, :, 1, :], (2, 0, 1))
    wv = jnp.transpose(w3[:, :, 2, :], (2, 0, 1))
    wq = wq.reshape(C, n_groups, gd)                                 # head-major per group
    wk = wk.reshape(C, n_groups, gd)
    wv = wv.reshape(C, n_groups, gd)
    wqkv = jnp.transpose(jnp.concatenate([wq, wk, wv], axis=-1),
                         (1, 0, 2))                                  # (n_groups, C, 3*gd)
    bq = (b3[:, :, 0] / scale).reshape(n_groups, gd)
    bk = b3[:, :, 1].reshape(n_groups, gd)
    bv = b3[:, :, 2].reshape(n_groups, gd)
    bqkv = jnp.concatenate([bq, bk, bv], axis=-1).reshape(n_groups, 1, 3 * gd)
    # Output projection: att columns are head-major ('n h m d -> n m (h d)'),
    # so the rows of w_proj.T split by head group.
    wo = w_proj.T.reshape(n_groups, gd, E)                           # (n_groups, gd, E)
    bo = b_proj.reshape(1, E)

    kernel = _make_kernel(G, d, M, m_pad, E, matmul_dtype)

    flops = N * n_groups * (2 * m_pad * C * 3 * gd                   # fused qkv proj
                            + G * 2 * (2 * m_pad * m_pad * d)        # scores + p@v
                            + 2 * m_pad * gd * E)                    # out-proj slice
    transcendentals = N * H * m_pad * (m_pad + 1)                    # exp + reciprocal
    bytes_accessed = 4 * (N * m_pad * C + N * m_pad * E              # x, out
                          + n_groups * (C * 3 * gd + 3 * gd + gd * E) + E)  # weights once
    cost = pl.CostEstimate(flops=flops, transcendentals=transcendentals,
                           bytes_accessed=bytes_accessed)

    # VMEM budget: resident weights + double-buffered x/out blocks + live
    # intermediates (qkv, scores, head_out, proj).  Clamp to [32 MiB, 64 MiB].
    vmem_bytes = 4 * (n_groups * (C * 3 * gd + 3 * gd + gd * E) + E
                      + 2 * m_pad * (C + E)
                      + m_pad * (3 * gd + 2 * m_pad + gd + E))
    vmem_limit = int(min(max(2 * vmem_bytes, 32 * 1024 * 1024), 64 * 1024 * 1024))

    out = pl.pallas_call(
        kernel,
        out_shape=jax.ShapeDtypeStruct((N, m_pad, E), jnp.float32),
        grid_spec=pltpu.PrefetchScalarGridSpec(
            num_scalar_prefetch=0,
            grid=(N, n_groups),
            in_specs=[
                pl.BlockSpec((1, m_pad, C), lambda n, g: (n, 0, 0)),          # x
                pl.BlockSpec((n_groups, C, 3 * gd), lambda n, g: (0, 0, 0)),  # Wqkv (resident)
                pl.BlockSpec((n_groups, 1, 3 * gd), lambda n, g: (0, 0, 0)),  # bqkv (resident)
                pl.BlockSpec((n_groups, gd, E), lambda n, g: (0, 0, 0)),      # Wproj slices (resident)
                pl.BlockSpec((1, E), lambda n, g: (0, 0)),                    # bproj (resident)
            ],
            out_specs=pl.BlockSpec((1, m_pad, E), lambda n, g: (n, 0, 0)),
        ),
        compiler_params=pltpu.CompilerParams(
            dimension_semantics=("parallel", "arbitrary"),
            vmem_limit_bytes=vmem_limit),
        cost_estimate=cost,
    )(x_in, wqkv, bqkv, wo, bo)

    return out if m_pad == M else out[:, :M, :]


# ---------------------------------------------------------------------------
# Pure-JAX reference (exact port of the PyTorch forward, eval mode)
# ---------------------------------------------------------------------------
def reference_forward(x, w_qkv, b_qkv, w_proj, b_proj, emb_size, num_heads):
    N, M, C = x.shape
    E, H = emb_size, num_heads
    d = E // H
    qkv = x @ w_qkv.T + b_qkv                                   # (N, M, 3E)
    qkv = qkv.reshape(N, M, H, d, 3).transpose(4, 0, 2, 1, 3)   # (3, N, H, M, d)
    q, k, v = qkv[0], qkv[1], qkv[2]
    q = q / (E ** 0.5)
    att = jnp.einsum('nhqd,nhkd->nhqk', q, k)
    att = jax.nn.softmax(att, axis=-1)                          # dropout: eval identity
    out = jnp.einsum('nhqv,nhvd->nhqd', att, v)
    out = out.transpose(0, 2, 1, 3).reshape(N, M, E)            # 'n h m d -> n m (h d)'
    return out @ w_proj.T + b_proj


if __name__ == "__main__":
    # Small shapes: N=2 batches, M=8 patches, in_dim=32, emb_size=32, heads=4 -> d=8.
    N, M, in_dim = 2, 8, 32
    emb_size, num_heads = 32, 4

    key = jax.random.PRNGKey(0)
    kx, kw1, kb1, kw2, kb2 = jax.random.split(key, 5)
    x = jax.random.normal(kx, (N, M, in_dim), dtype=jnp.float32)

    # PyTorch nn.Linear-style uniform init.
    b1 = 1.0 / np.sqrt(in_dim)
    w_qkv = jax.random.uniform(kw1, (3 * emb_size, in_dim),
                               minval=-b1, maxval=b1, dtype=jnp.float32)
    b_qkv = jax.random.uniform(kb1, (3 * emb_size,),
                               minval=-b1, maxval=b1, dtype=jnp.float32)
    b2 = 1.0 / np.sqrt(emb_size)
    w_proj = jax.random.uniform(kw2, (emb_size, emb_size),
                                minval=-b2, maxval=b2, dtype=jnp.float32)
    b_proj = jax.random.uniform(kb2, (emb_size,),
                                minval=-b2, maxval=b2, dtype=jnp.float32)

    out = multi_head_self_attention_forward(x, w_qkv, b_qkv, w_proj, b_proj,
                                            emb_size, num_heads)
    out = jax.block_until_ready(out)

    ref = reference_forward(x, w_qkv, b_qkv, w_proj, b_proj, emb_size, num_heads)
    assert out.shape == (N, M, emb_size)
    # Tolerance loosened (vs 1e-5) for the approx EUP reciprocal in the deferred
    # softmax normalization; everything else is exact f32.
    np.testing.assert_allclose(np.asarray(out), np.asarray(ref),
                               rtol=5e-3, atol=5e-3)
    print("KERNEL_OK")
</pallas_src>

<mosaic_0001>
module attributes {stable_mosaic.version = 11 : i64} {
  func.func @kernel(%arg0: i32, %arg1: i32, %arg2: memref<1x8x32xf32, #tpu.memory_space<vmem>>, %arg3: memref<1x32x96xf32, #tpu.memory_space<vmem>>, %arg4: memref<1x1x96xf32, #tpu.memory_space<vmem>>, %arg5: memref<1x32x32xf32, #tpu.memory_space<vmem>>, %arg6: memref<1x32xf32, #tpu.memory_space<vmem>>, %arg7: memref<1x8x32xf32, #tpu.memory_space<vmem>>) attributes {dimension_semantics = [#tpu.dimension_semantics<parallel>, #tpu.dimension_semantics<arbitrary>], iteration_bounds = array<i64: 2, 1>, scalar_prefetch = 0 : i64, scratch_operands = 0 : i64, tpu.core_type = #tpu.core_type<tc>, window_params = [{transform_indices = @transform_0, window_bounds = array<i64: 1, 8, 32>}, {pipeline_mode = #tpu.pipeline_mode<synchronous>, transform_indices = @transform_1, window_bounds = array<i64: 1, 32, 96>}, {pipeline_mode = #tpu.pipeline_mode<synchronous>, transform_indices = @transform_2, window_bounds = array<i64: 1, 1, 96>}, {pipeline_mode = #tpu.pipeline_mode<synchronous>, transform_indices = @transform_3, window_bounds = array<i64: 1, 32, 32>}, {pipeline_mode = #tpu.pipeline_mode<synchronous>, transform_indices = @transform_4, window_bounds = array<i64: 1, 32>}, {transform_indices = @transform_5, window_bounds = array<i64: 1, 8, 32>}]} {
    %c0_i32 = arith.constant 0 : i32
    %0 = arith.cmpi eq, %arg1, %c0_i32 : i32
    %1 = arith.extui %0 : i1 to i32
    %c0_i32_0 = arith.constant 0 : i32
    %2 = arith.cmpi ne, %1, %c0_i32_0 : i32
    scf.if %2 {
      %c0_32 = arith.constant 0 : index
      %c0_33 = arith.constant 0 : index
      %88 = vector.load %arg6[%c0_32, %c0_33] : memref<1x32xf32, #tpu.memory_space<vmem>>, vector<1x32xf32>
      %89 = vector.shape_cast %88 : vector<1x32xf32> to vector<1x32xf32>
      %90 = vector.broadcast %89 : vector<1x32xf32> to vector<8x32xf32>
      %c0_34 = arith.constant 0 : index
      %c0_35 = arith.constant 0 : index
      %c0_36 = arith.constant 0 : index
      %91 = vector.load %arg7[%c0_34, %c0_35, %c0_36] : memref<1x8x32xf32, #tpu.memory_space<vmem>>, vector<1x8x32xf32>
      %92 = vector.shape_cast %91 : vector<1x8x32xf32> to vector<8x32xf32>
      %93 = vector.shape_cast %90 : vector<8x32xf32> to vector<1x8x32xf32>
      tpu.vector_store %arg7[%c0_34, %c0_35, %c0_36], %93 {strides = array<i32>} : memref<1x8x32xf32, #tpu.memory_space<vmem>>, vector<1x8x32xf32>,
    } else {
    }
    %c0 = arith.constant 0 : index
    %c0_1 = arith.constant 0 : index
    %c0_2 = arith.constant 0 : index
    %3 = vector.load %arg2[%c0, %c0_1, %c0_2] : memref<1x8x32xf32, #tpu.memory_space<vmem>>, vector<1x8x32xf32>
    %4 = vector.shape_cast %3 : vector<1x8x32xf32> to vector<8x32xf32>
    %5 = arith.index_cast %arg1 : i32 to index
    %c0_3 = arith.constant 0 : index
    %c0_4 = arith.constant 0 : index
    %6 = vector.load %arg3[%5, %c0_3, %c0_4] : memref<1x32x96xf32, #tpu.memory_space<vmem>>, vector<1x32x96xf32>
    %7 = vector.shape_cast %6 : vector<1x32x96xf32> to vector<32x96xf32>
    %cst = arith.constant dense<0.000000e+00> : vector<8x96xf32>
    %8 = tpu.matmul %4, %7, %cst {dimension_numbers = #tpu.dot_dimension_numbers<[1], [0], [0], [1], [0, 0, 1, 1], [], []>} : vector<8x32xf32>, vector<32x96xf32>, vector<8x96xf32> -> vector<8x96xf32>
    %9 = arith.index_cast %arg1 : i32 to index
    %c0_5 = arith.constant 0 : index
    %c0_6 = arith.constant 0 : index
    %10 = vector.load %arg4[%9, %c0_5, %c0_6] : memref<1x1x96xf32, #tpu.memory_space<vmem>>, vector<1x1x96xf32>
    %11 = vector.shape_cast %10 : vector<1x1x96xf32> to vector<1x96xf32>
    %12 = vector.broadcast %11 : vector<1x96xf32> to vector<8x96xf32>
    %13 = arith.addf %8, %12 : vector<8x96xf32>
    %14 = vector.extract_strided_slice %13 {offsets = [0, 0], sizes = [8, 32], strides = [1, 1]} : vector<8x96xf32> to vector<8x32xf32>
    %15 = vector.extract_strided_slice %13 {offsets = [0, 32], sizes = [8, 32], strides = [1, 1]} : vector<8x96xf32> to vector<8x32xf32>
    %16 = vector.extract_strided_slice %13 {offsets = [0, 64], sizes = [8, 32], strides = [1, 1]} : vector<8x96xf32> to vector<8x32xf32>
    %17 = vector.extract_strided_slice %14 {offsets = [0, 0], sizes = [8, 8], strides = [1, 1]} : vector<8x32xf32> to vector<8x8xf32>
    %18 = vector.extract_strided_slice %15 {offsets = [0, 0], sizes = [8, 8], strides = [1, 1]} : vector<8x32xf32> to vector<8x8xf32>
    %19 = vector.extract_strided_slice %16 {offsets = [0, 0], sizes = [8, 8], strides = [1, 1]} : vector<8x32xf32> to vector<8x8xf32>
    %cst_7 = arith.constant dense<0.000000e+00> : vector<8x8xf32>
    %20 = tpu.matmul %17, %18, %cst_7 {dimension_numbers = #tpu.dot_dimension_numbers<[1], [1], [0], [0], [0, 0, 1, 0], [], []>} : vector<8x8xf32>, vector<8x8xf32>, vector<8x8xf32> -> vector<8x8xf32>
    %cst_8 = arith.constant dense<0xFF800000> : vector<8xf32>
    %21 = vector.multi_reduction <maximumf>, %20, %cst_8 [1] : vector<8x8xf32> to vector<8xf32>
    %22 = vector.shape_cast %21 : vector<8xf32> to vector<8x1xf32>
    %23 = vector.broadcast %22 : vector<8x1xf32> to vector<8x8xf32>
    %24 = arith.subf %20, %23 : vector<8x8xf32>
    %25 = math.exp %24 : vector<8x8xf32>
    %cst_9 = arith.constant dense<0.000000e+00> : vector<8xf32>
    %26 = vector.multi_reduction <add>, %25, %cst_9 [1] : vector<8x8xf32> to vector<8xf32>
    %27 = vector.shape_cast %26 : vector<8xf32> to vector<8x1xf32>
    %28 = tpu.reciprocal %27 {approx = true} : vector<8x1xf32> -> vector<8x1xf32>
    %cst_10 = arith.constant dense<0.000000e+00> : vector<8x8xf32>
    %29 = tpu.matmul %25, %19, %cst_10 {dimension_numbers = #tpu.dot_dimension_numbers<[1], [0], [0], [1], [0, 0, 1, 1], [], []>} : vector<8x8xf32>, vector<8x8xf32>, vector<8x8xf32> -> vector<8x8xf32>
    %30 = vector.broadcast %28 : vector<8x1xf32> to vector<8x8xf32>
    %31 = arith.mulf %29, %30 : vector<8x8xf32>
    %32 = vector.extract_strided_slice %14 {offsets = [0, 8], sizes = [8, 8], strides = [1, 1]} : vector<8x32xf32> to vector<8x8xf32>
    %33 = vector.extract_strided_slice %15 {offsets = [0, 8], sizes = [8, 8], strides = [1, 1]} : vector<8x32xf32> to vector<8x8xf32>
    %34 = vector.extract_strided_slice %16 {offsets = [0, 8], sizes = [8, 8], strides = [1, 1]} : vector<8x32xf32> to vector<8x8xf32>
    %cst_11 = arith.constant dense<0.000000e+00> : vector<8x8xf32>
    %35 = tpu.matmul %32, %33, %cst_11 {dimension_numbers = #tpu.dot_dimension_numbers<[1], [1], [0], [0], [0, 0, 1, 0], [], []>} : vector<8x8xf32>, vector<8x8xf32>, vector<8x8xf32> -> vector<8x8xf32>
    %cst_12 = arith.constant dense<0xFF800000> : vector<8xf32>
    %36 = vector.multi_reduction <maximumf>, %35, %cst_12 [1] : vector<8x8xf32> to vector<8xf32>
    %37 = vector.shape_cast %36 : vector<8xf32> to vector<8x1xf32>
    %38 = vector.broadcast %37 : vector<8x1xf32> to vector<8x8xf32>
    %39 = arith.subf %35, %38 : vector<8x8xf32>
    %40 = math.exp %39 : vector<8x8xf32>
    %cst_13 = arith.constant dense<0.000000e+00> : vector<8xf32>
    %41 = vector.multi_reduction <add>, %40, %cst_13 [1] : vector<8x8xf32> to vector<8xf32>
    %42 = vector.shape_cast %41 : vector<8xf32> to vector<8x1xf32>
    %43 = tpu.reciprocal %42 {approx = true} : vector<8x1xf32> -> vector<8x1xf32>
    %cst_14 = arith.constant dense<0.000000e+00> : vector<8x8xf32>
    %44 = tpu.matmul %40, %34, %cst_14 {dimension_numbers = #tpu.dot_dimension_numbers<[1], [0], [0], [1], [0, 0, 1, 1], [], []>} : vector<8x8xf32>, vector<8x8xf32>, vector<8x8xf32> -> vector<8x8xf32>
    %45 = vector.broadcast %43 : vector<8x1xf32> to vector<8x8xf32>
    %46 = arith.mulf %44, %45 : vector<8x8xf32>
    %47 = vector.extract_strided_slice %14 {offsets = [0, 16], sizes = [8, 8], strides = [1, 1]} : vector<8x32xf32> to vector<8x8xf32>
    %48 = vector.extract_strided_slice %15 {offsets = [0, 16], sizes = [8, 8], strides = [1, 1]} : vector<8x32xf32> to vector<8x8xf32>
    %49 = vector.extract_strided_slice %16 {offsets = [0, 16], sizes = [8, 8], strides = [1, 1]} : vector<8x32xf32> to vector<8x8xf32>
    %cst_15 = arith.constant dense<0.000000e+00> : vector<8x8xf32>
    %50 = tpu.matmul %47, %48, %cst_15 {dimension_numbers = #tpu.dot_dimension_numbers<[1], [1], [0], [0], [0, 0, 1, 0], [], []>} : vector<8x8xf32>, vector<8x8xf32>, vector<8x8xf32> -> vector<8x8xf32>
    %cst_16 = arith.constant dense<0xFF800000> : vector<8xf32>
    %51 = vector.multi_reduction <maximumf>, %50, %cst_16 [1] : vector<8x8xf32> to vector<8xf32>
    %52 = vector.shape_cast %51 : vector<8xf32> to vector<8x1xf32>
    %53 = vector.broadcast %52 : vector<8x1xf32> to vector<8x8xf32>
    %54 = arith.subf %50, %53 : vector<8x8xf32>
    %55 = math.exp %54 : vector<8x8xf32>
    %cst_17 = arith.constant dense<0.000000e+00> : vector<8xf32>
    %56 = vector.multi_reduction <add>, %55, %cst_17 [1] : vector<8x8xf32> to vector<8xf32>
    %57 = vector.shape_cast %56 : vector<8xf32> to vector<8x1xf32>
    %58 = tpu.reciprocal %57 {approx = true} : vector<8x1xf32> -> vector<8x1xf32>
    %cst_18 = arith.constant dense<0.000000e+00> : vector<8x8xf32>
    %59 = tpu.matmul %55, %49, %cst_18 {dimension_numbers = #tpu.dot_dimension_numbers<[1], [0], [0], [1], [0, 0, 1, 1], [], []>} : vector<8x8xf32>, vector<8x8xf32>, vector<8x8xf32> -> vector<8x8xf32>
    %60 = vector.broadcast %58 : vector<8x1xf32> to vector<8x8xf32>
    %61 = arith.mulf %59, %60 : vector<8x8xf32>
    %62 = vector.extract_strided_slice %14 {offsets = [0, 24], sizes = [8, 8], strides = [1, 1]} : vector<8x32xf32> to vector<8x8xf32>
    %63 = vector.extract_strided_slice %15 {offsets = [0, 24], sizes = [8, 8], strides = [1, 1]} : vector<8x32xf32> to vector<8x8xf32>
    %64 = vector.extract_strided_slice %16 {offsets = [0, 24], sizes = [8, 8], strides = [1, 1]} : vector<8x32xf32> to vector<8x8xf32>
    %cst_19 = arith.constant dense<0.000000e+00> : vector<8x8xf32>
    %65 = tpu.matmul %62, %63, %cst_19 {dimension_numbers = #tpu.dot_dimension_numbers<[1], [1], [0], [0], [0, 0, 1, 0], [], []>} : vector<8x8xf32>, vector<8x8xf32>, vector<8x8xf32> -> vector<8x8xf32>
    %cst_20 = arith.constant dense<0xFF800000> : vector<8xf32>
    %66 = vector.multi_reduction <maximumf>, %65, %cst_20 [1] : vector<8x8xf32> to vector<8xf32>
    %67 = vector.shape_cast %66 : vector<8xf32> to vector<8x1xf32>
    %68 = vector.broadcast %67 : vector<8x1xf32> to vector<8x8xf32>
    %69 = arith.subf %65, %68 : vector<8x8xf32>
    %70 = math.exp %69 : vector<8x8xf32>
    %cst_21 = arith.constant dense<0.000000e+00> : vector<8xf32>
    %71 = vector.multi_reduction <add>, %70, %cst_21 [1] : vector<8x8xf32> to vector<8xf32>
    %72 = vector.shape_cast %71 : vector<8xf32> to vector<8x1xf32>
    %73 = tpu.reciprocal %72 {approx = true} : vector<8x1xf32> -> vector<8x1xf32>
    %cst_22 = arith.constant dense<0.000000e+00> : vector<8x8xf32>
    %74 = tpu.matmul %70, %64, %cst_22 {dimension_numbers = #tpu.dot_dimension_numbers<[1], [0], [0], [1], [0, 0, 1, 1], [], []>} : vector<8x8xf32>, vector<8x8xf32>, vector<8x8xf32> -> vector<8x8xf32>
    %75 = vector.broadcast %73 : vector<8x1xf32> to vector<8x8xf32>
    %76 = arith.mulf %74, %75 : vector<8x8xf32>
    %77 = tpu.concatenate %31, %46, %61, %76 in 1 : vector<8x8xf32>, vector<8x8xf32>, vector<8x8xf32>, vector<8x8xf32> -> vector<8x32xf32>
    %c0_23 = arith.constant 0 : index
    %c0_24 = arith.constant 0 : index
    %c0_25 = arith.constant 0 : index
    %78 = vector.load %arg7[%c0_23, %c0_24, %c0_25] : memref<1x8x32xf32, #tpu.memory_space<vmem>>, vector<1x8x32xf32>
    %79 = vector.shape_cast %78 : vector<1x8x32xf32> to vector<8x32xf32>
    %80 = arith.index_cast %arg1 : i32 to index
    %c0_26 = arith.constant 0 : index
    %c0_27 = arith.constant 0 : index
    %81 = vector.load %arg5[%80, %c0_26, %c0_27] : memref<1x32x32xf32, #tpu.memory_space<vmem>>, vector<1x32x32xf32>
    %82 = vector.shape_cast %81 : vector<1x32x32xf32> to vector<32x32xf32>
    %cst_28 = arith.constant dense<0.000000e+00> : vector<8x32xf32>
    %83 = tpu.matmul %77, %82, %cst_28 {dimension_numbers = #tpu.dot_dimension_numbers<[1], [0], [0], [1], [0, 0, 1, 1], [], []>} : vector<8x32xf32>, vector<32x32xf32>, vector<8x32xf32> -> vector<8x32xf32>
    %84 = arith.addf %79, %83 : vector<8x32xf32>
    %c0_29 = arith.constant 0 : index
    %c0_30 = arith.constant 0 : index
    %c0_31 = arith.constant 0 : index
    %85 = vector.load %arg7[%c0_29, %c0_30, %c0_31] : memref<1x8x32xf32, #tpu.memory_space<vmem>>, vector<1x8x32xf32>
    %86 = vector.shape_cast %85 : vector<1x8x32xf32> to vector<8x32xf32>
    %87 = vector.shape_cast %84 : vector<8x32xf32> to vector<1x8x32xf32>
    tpu.vector_store %arg7[%c0_29, %c0_30, %c0_31], %87 {strides = array<i32>} : memref<1x8x32xf32, #tpu.memory_space<vmem>>, vector<1x8x32xf32>,
    return
  }
  func.func @transform_0(%arg0: i32, %arg1: i32) -> (i32, i32, i32) {
    %c0_i32 = arith.constant 0 : i32
    %c0_i32_0 = arith.constant 0 : i32
    %c0_i32_1 = arith.constant 0 : i32
    return %arg0, %c0_i32, %c0_i32_0 : i32, i32, i32
  }
  func.func @transform_1(%arg0: i32, %arg1: i32) -> (i32, i32, i32) {
    %c0_i32 = arith.constant 0 : i32
    %c0_i32_0 = arith.constant 0 : i32
    %c0_i32_1 = arith.constant 0 : i32
    %c0_i32_2 = arith.constant 0 : i32
    return %c0_i32, %c0_i32_0, %c0_i32_1 : i32, i32, i32
  }
  func.func @transform_2(%arg0: i32, %arg1: i32) -> (i32, i32, i32) {
    %c0_i32 = arith.constant 0 : i32
    %c0_i32_0 = arith.constant 0 : i32
    %c0_i32_1 = arith.constant 0 : i32
    %c0_i32_2 = arith.constant 0 : i32
    return %c0_i32, %c0_i32_0, %c0_i32_1 : i32, i32, i32
  }
  func.func @transform_3(%arg0: i32, %arg1: i32) -> (i32, i32, i32) {
    %c0_i32 = arith.constant 0 : i32
    %c0_i32_0 = arith.constant 0 : i32
    %c0_i32_1 = arith.constant 0 : i32
    %c0_i32_2 = arith.constant 0 : i32
    return %c0_i32, %c0_i32_0, %c0_i32_1 : i32, i32, i32
  }
  func.func @transform_4(%arg0: i32, %arg1: i32) -> (i32, i32) {
    %c0_i32 = arith.constant 0 : i32
    %c0_i32_0 = arith.constant 0 : i32
    %c0_i32_1 = arith.constant 0 : i32
    return %c0_i32, %c0_i32_0 : i32, i32
  }
  func.func @transform_5(%arg0: i32, %arg1: i32) -> (i32, i32, i32) {
    %c0_i32 = arith.constant 0 : i32
    %c0_i32_0 = arith.constant 0 : i32
    %c0_i32_1 = arith.constant 0 : i32
    return %arg0, %c0_i32, %c0_i32_0 : i32, i32, i32
  }
}

</mosaic_0001>

<llo_original>
// kernel: tpu_custom_call.1
$region0: #{tpu_custom_call.1}
  #allocation0 [shape = 'u32[]', space=smem, size = 0x4, offset = 0x4, fixed_abs, tag = 'smem constant byte address 0x4 - core index']
  #allocation1 [shape = 'u32[144,128]{1,0:T(1,128)}', space=vmem, size = 0x12000, scoped, tag = 'internal scratch']
  %s0 = inlined_call_operand.hbm [shape: f32[2,8,32], index: 0, kind: input, shape index: {}]
  %s1 = inlined_call_operand.hbm [shape: f32[1,32,96], index: 1, kind: input, shape index: {}]
  %s2 = inlined_call_operand.vmem [shape: f32[1,1,96], index: 2, kind: input, shape index: {}]
  %s3 = inlined_call_operand.hbm [shape: f32[1,32,32], index: 3, kind: input, shape index: {}]
  %s4 = inlined_call_operand.vmem [shape: f32[1,32], index: 4, kind: input, shape index: {}]
  %s5 = inlined_call_operand.hbm [shape: f32[2,8,32], index: 5, kind: output, shape index: {}]
  %s6 = sld [smem:[#allocation0]]
  $region69: #{tpu_custom_call.1} parent=0
    _
  %s8 = ssub.s32 1, %s6
  %s9 = scalar_select 0, %s8, %s6
  $region1: #{tpu_custom_call.1} parent=0
    #allocation2 [shape = 'u8[8192]{0}', space=vmem, size = 0x2000, scoped, tag = 'input window, operand 0']
    #allocation3 [shape = 's32[2]{0}', space=sflag, size = 0x8, scoped, tag = 'scoped memory for tpu_custom_call.1']
    #allocation4 [shape = 's32[2]{0}', space=sflag, size = 0x8, scoped, tag = 'scoped memory for tpu_custom_call.1']
    #allocation5 [shape = 'u8[16384]{0}', space=vmem, size = 0x4000, scoped, tag = 'input window, operand 1, single buffered']
    #allocation6 [shape = 's32[1]{0}', space=sflag, size = 0x4, scoped, tag = 'scoped memory for tpu_custom_call.1']
    #allocation7 [shape = 'u8[16384]{0}', space=vmem, size = 0x4000, scoped, tag = 'input window, operand 3, single buffered']
    #allocation8 [shape = 'u8[8192]{0}', space=vmem, size = 0x2000, scoped, tag = 'output window, operand 0']
    %10 = vsyncpa [#allocation3], 0
    %s11 = scalar_lea.sflag [#allocation3], 1
    %12 = vsyncpa %s11, 0
    %13 = vsyncpa [#allocation6], 0
    %14 = vsyncpa [#allocation4], 0
    %s15 = scalar_lea.sflag [#allocation4], 1
    %16 = vsyncpa %s15, 0
    loop: start=0, step=1, limit=4
    $region2: #{tpu_custom_call.1} parent=1 // loop_pre_header
      _
    $region3: #{tpu_custom_call.1} parent=1 // loop_header
      %s18 = sphi 0, %s22
      %p19 = scmp.ge.s32.totalorder %s18, 4
      %s25 = sphi 0, %s37
      %s26 = sphi 0, %s33
      %s27 = sphi 0, %s25
      %s28 = sphi 0, %s26
      %s29 = sphi 0, %s27
      %s30 = sphi 0, %s28
      %s40 = sphi 0, %s42
      %s43 = sphi 0, %s40
      %s44 = sphi 0, %s43
      %s60 = sphi 0, %s44
      %s64 = sphi 0, %s64
      %s66 = sphi 0, %s64
      %s67 = sphi 0, %s66
      %s81 = sphi 0, %s67
      %s85 = sphi 0, %s85
      %s87 = sphi 0, %s85
      %s88 = sphi 0, %s87
      %s102 = sphi 0, %s88
      %s106 = sphi 0, %s106
      %s108 = sphi 0, %s106
      %s109 = sphi 0, %s108
      %s123 = sphi 0, %s109
      %s127 = sphi 0, %s127
      %s129 = sphi 0, %s127
      %s130 = sphi 0, %s129
      %s144 = sphi 0, %s130
      %s150 = sphi 0, %s152
      %s153 = sphi 0, %s150
      %s154 = sphi 0, %s153
      %s170 = sphi 0, %s154
    $region4: #{tpu_custom_call.1} parent=1 // loop_header_branch
      %21 = sbr.rel (%p19) target = $region8
    $region5: #{tpu_custom_call.1} parent=1 // loop_body
      %s23 = ssub.s32 %s18, 1
      %s24 = ssub.s32 %s18, 2
      %s31 = sadd.s32 1, %s26
      %p32 = scmp.ge.s32.totalorder %s31, 1
      %s33 = scalar_select %p32, 0, %s31
      %s34 = sadd.s32 1, %s25
      %s35 = scalar_select %p32, %s34, %s25
      %p36 = scmp.ge.s32.totalorder %s35, 2
      %s37 = scalar_select %p36, 0, %s35
      %s38 = ssub.s32 %s25, %s37
      %p39 = scmp.eq.s32.totalorder %s38, 0
      %s41 = sadd.s32 %s40, 1
      %s42 = scalar_select %p39, %s40, %s41
      %p45 = pneg %p39
      %p46 = scmp.eq.s32.totalorder %s18, 1
      %p47 = por %p45, %p46
      %p48 = scmp.ne.s32.totalorder %s40, %s43
      %p49 = scmp.eq.s32.totalorder %s18, 0
      %p50 = por %p48, %p49
      %p51 = scmp.ne.s32.totalorder %s40, %s43
      %p52 = scmp.eq.s32.totalorder %s23, 1
      %p53 = por %p51, %p52
      %p54 = scmp.ne.s32.totalorder %s43, %s44
      %p55 = scmp.eq.s32.totalorder %s23, 0
      %p56 = por %p54, %p55
      %p57 = scmp.ne.s32.totalorder %s43, %s44
      %p58 = scmp.eq.s32.totalorder %s24, 1
      %p59 = por %p57, %p58
      %p61 = scmp.ne.s32.totalorder %s44, %s60
      %p62 = scmp.eq.s32.totalorder %s24, 0
      %p63 = por %p61, %p62
      %s65 = sadd.s32 %s64, 1
      %p68 = scmp.eq.s32.totalorder %s18, 1
      %p69 = scmp.ne.s32.totalorder %s64, %s66
      %p70 = scmp.eq.s32.totalorder %s18, 0
      %p71 = por %p69, %p70
      %p72 = scmp.ne.s32.totalorder %s64, %s66
      %p73 = scmp.eq.s32.totalorder %s23, 1
      %p74 = por %p72, %p73
      %p75 = scmp.ne.s32.totalorder %s66, %s67
      %p76 = scmp.eq.s32.totalorder %s23, 0
      %p77 = por %p75, %p76
      %p78 = scmp.ne.s32.totalorder %s66, %s67
      %p79 = scmp.eq.s32.totalorder %s24, 1
      %p80 = por %p78, %p79
      %p82 = scmp.ne.s32.totalorder %s67, %s81
      %p83 = scmp.eq.s32.totalorder %s24, 0
      %p84 = por %p82, %p83
      %s86 = sadd.s32 %s85, 1
      %p89 = scmp.eq.s32.totalorder %s18, 1
      %p90 = scmp.ne.s32.totalorder %s85, %s87
      %p91 = scmp.eq.s32.totalorder %s18, 0
      %p92 = por %p90, %p91
      %p93 = scmp.ne.s32.totalorder %s85, %s87
      %p94 = scmp.eq.s32.totalorder %s23, 1
      %p95 = por %p93, %p94
      %p96 = scmp.ne.s32.totalorder %s87, %s88
      %p97 = scmp.eq.s32.totalorder %s23, 0
      %p98 = por %p96, %p97
      %p99 = scmp.ne.s32.totalorder %s87, %s88
      %p100 = scmp.eq.s32.totalorder %s24, 1
      %p101 = por %p99, %p100
      %p103 = scmp.ne.s32.totalorder %s88, %s102
      %p104 = scmp.eq.s32.totalorder %s24, 0
      %p105 = por %p103, %p104
      %s107 = sadd.s32 %s106, 1
      %p110 = scmp.eq.s32.totalorder %s18, 1
      %p111 = scmp.ne.s32.totalorder %s106, %s108
      %p112 = scmp.eq.s32.totalorder %s18, 0
      %p113 = por %p111, %p112
      %p114 = scmp.ne.s32.totalorder %s106, %s108
      %p115 = scmp.eq.s32.totalorder %s23, 1
      %p116 = por %p114, %p115
      %p117 = scmp.ne.s32.totalorder %s108, %s109
      %p118 = scmp.eq.s32.totalorder %s23, 0
      %p119 = por %p117, %p118
      %p120 = scmp.ne.s32.totalorder %s108, %s109
      %p121 = scmp.eq.s32.totalorder %s24, 1
      %p122 = por %p120, %p121
      %p124 = scmp.ne.s32.totalorder %s109, %s123
      %p125 = scmp.eq.s32.totalorder %s24, 0
      %p126 = por %p124, %p125
      %s128 = sadd.s32 %s127, 1
      %p131 = scmp.eq.s32.totalorder %s18, 1
      %p132 = scmp.ne.s32.totalorder %s127, %s129
      %p133 = scmp.eq.s32.totalorder %s18, 0
      %p134 = por %p132, %p133
      %p135 = scmp.ne.s32.totalorder %s127, %s129
      %p136 = scmp.eq.s32.totalorder %s23, 1
      %p137 = por %p135, %p136
      %p138 = scmp.ne.s32.totalorder %s129, %s130
      %p139 = scmp.eq.s32.totalorder %s23, 0
      %p140 = por %p138, %p139
      %p141 = scmp.ne.s32.totalorder %s129, %s130
      %p142 = scmp.eq.s32.totalorder %s24, 1
      %p143 = por %p141, %p142
      %p145 = scmp.ne.s32.totalorder %s130, %s144
      %p146 = scmp.eq.s32.totalorder %s24, 0
      %p147 = por %p145, %p146
      %s148 = ssub.s32 %s25, %s37
      %p149 = scmp.eq.s32.totalorder %s148, 0
      %s151 = sadd.s32 %s150, 1
      %s152 = scalar_select %p149, %s150, %s151
      %p155 = pneg %p149
      %p156 = scmp.eq.s32.totalorder %s18, 1
      %p157 = por %p155, %p156
      %p158 = scmp.ne.s32.totalorder %s150, %s153
      %p159 = scmp.eq.s32.totalorder %s18, 0
      %p160 = por %p158, %p159
      %p161 = scmp.ne.s32.totalorder %s150, %s153
      %p162 = scmp.eq.s32.totalorder %s23, 1
      %p163 = por %p161, %p162
      %p164 = scmp.ne.s32.totalorder %s153, %s154
      %p165 = scmp.eq.s32.totalorder %s23, 0
      %p166 = por %p164, %p165
      %p167 = scmp.ne.s32.totalorder %s153, %s154
      %p168 = scmp.eq.s32.totalorder %s24, 1
      %p169 = por %p167, %p168
      %p171 = scmp.ne.s32.totalorder %s154, %s170
      %p172 = scmp.eq.s32.totalorder %s24, 0
      %p173 = por %p171, %p172
      %p174 = scmp.le.s32.totalorder 1, %s18
      %p175 = scmp.lt.s32.totalorder %s18, 3
      %p176 = pnand %p174, %p175
      %p177 = pneg %p176
      // Predicated region
      $region9: #{tpu_custom_call.1} parent=5 // pred_check
        _
      $region10: #{tpu_custom_call.1} parent=5 // pred_check_branch
        %179 = sbr.rel (%p176) target = $region12
      $region11: #{tpu_custom_call.1} parent=5 // pred_region
        %s180 = ssub.s32 %s18, 1
        // Predicated region
        $region13: #{tpu_custom_call.1} parent=11 // pred_check
          %p181 = pneg %p77
        $region14: #{tpu_custom_call.1} parent=11 // pred_check_branch
          %183 = sbr.rel (%p181) target = $region16
        $region15: #{tpu_custom_call.1} parent=11 // pred_region
          %s185 = ssub.s32 512, 512
          %186 = vsyncadd [#allocation6], %s185
          %s187 = sshll.u32 [#allocation5], 4
          %s188 = int_to_ptr.vmem [resolvable:$true] %s187
          %193 = dma.hbm_to_vmem [thread:$0]  %s1, 512, %s188, [#allocation6], 128, 128, 8
        $region16: #{tpu_custom_call.1} parent=11 // pred_fallthru
          _
        // Predicated region
        $region17: #{tpu_custom_call.1} parent=11 // pred_check
          %p194 = pneg %p98
        $region18: #{tpu_custom_call.1} parent=11 // pred_check_branch
          %196 = sbr.rel (%p194) target = $region20
        $region19: #{tpu_custom_call.1} parent=11 // pred_region
          _
        $region20: #{tpu_custom_call.1} parent=11 // pred_fallthru
          _
        // Predicated region
        $region21: #{tpu_custom_call.1} parent=11 // pred_check
          %p197 = pneg %p119
        $region22: #{tpu_custom_call.1} parent=11 // pred_check_branch
          %199 = sbr.rel (%p197) target = $region24
        $region23: #{tpu_custom_call.1} parent=11 // pred_region
          %s201 = ssub.s32 512, 512
          %202 = vsyncadd [#allocation6], %s201
          %s203 = sshll.u32 [#allocation7], 4
          %s204 = int_to_ptr.vmem [resolvable:$true] %s203
          %209 = dma.hbm_to_vmem [thread:$0]  %s3, 512, %s204, [#allocation6], 128, 128, 8
        $region24: #{tpu_custom_call.1} parent=11 // pred_fallthru
          _
        // Predicated region
        $region25: #{tpu_custom_call.1} parent=11 // pred_check
          %p210 = pneg %p140
        $region26: #{tpu_custom_call.1} parent=11 // pred_check_branch
          %212 = sbr.rel (%p210) target = $region28
        $region27: #{tpu_custom_call.1} parent=11 // pred_region
          _
        $region28: #{tpu_custom_call.1} parent=11 // pred_fallthru
          _
      $region12: #{tpu_custom_call.1} parent=5 // pred_fallthru
        _
      %p213 = scmp.lt.s32.totalorder %s18, 2
      // Predicated region
      $region29: #{tpu_custom_call.1} parent=5 // pred_check
        %p214 = pneg %p213
      $region30: #{tpu_custom_call.1} parent=5 // pred_check_branch
        %216 = sbr.rel (%p214) target = $region32
      $region31: #{tpu_custom_call.1} parent=5 // pred_region
        // Predicated region
        $region33: #{tpu_custom_call.1} parent=31 // pred_check
          %p217 = pneg %p50
        $region34: #{tpu_custom_call.1} parent=31 // pred_check_branch
          %219 = sbr.rel (%p217) target = $region36
        $region35: #{tpu_custom_call.1} parent=31 // pred_region
          %s220 = sand.u32 %s40, 1
          %s221 = scalar_lea.sflag [#allocation3], %s220
          %s222 = sand.u32 %s40, 1
          %s223 = smul.addr %s222, 8
          %s224 = scalar_lea.vmem [#allocation2], %s223
          %s226 = ssub.s32 128, 128
          %227 = vsyncadd %s221, %s226
          %s228 = smul.addr %s25, 128
          %s229 = scalar_lea.hbm %s0, %s228
          %s231 = sshll.u32 %s224, 4
          %s232 = int_to_ptr.vmem [resolvable:$true] %s231
          %234 = dma.hbm_to_vmem [thread:$0]  %s229, 128, %s232, %s221
        $region36: #{tpu_custom_call.1} parent=31 // pred_fallthru
          _
      $region32: #{tpu_custom_call.1} parent=5 // pred_fallthru
        _
      %p235 = scmp.le.s32.totalorder 1, %s18
      %p236 = scmp.lt.s32.totalorder %s18, 3
      %p237 = pnand %p235, %p236
      %p238 = pneg %p237
      // Predicated region
      $region37: #{tpu_custom_call.1} parent=5 // pred_check
        _
      $region38: #{tpu_custom_call.1} parent=5 // pred_check_branch
        %240 = sbr.rel (%p237) target = $region40
      $region39: #{tpu_custom_call.1} parent=5 // pred_region
        %s241 = ssub.s32 %s18, 1
        %s242 = sand.u32 %s43, 1
        %s243 = scalar_lea.sflag [#allocation3], %s242
        %s244 = sand.u32 %s43, 1
        %s245 = smul.addr %s244, 8
        %s246 = scalar_lea.vmem [#allocation2], %s245
        // Predicated region
        $region41: #{tpu_custom_call.1} parent=39 // pred_check
          %p247 = pneg %p56
        $region42: #{tpu_custom_call.1} parent=39 // pred_check_branch
          %249 = sbr.rel (%p247) target = $region44
        $region43: #{tpu_custom_call.1} parent=39 // pred_region
          %250 = dma.done %s243, 128
        $region44: #{tpu_custom_call.1} parent=39 // pred_fallthru
          _
        // Predicated region
        $region45: #{tpu_custom_call.1} parent=39 // pred_check
          %p251 = pneg %p77
        $region46: #{tpu_custom_call.1} parent=39 // pred_check_branch
          %253 = sbr.rel (%p251) target = $region48
        $region47: #{tpu_custom_call.1} parent=39 // pred_region
          %254 = dma.done [#allocation6], 512
        $region48: #{tpu_custom_call.1} parent=39 // pred_fallthru
          _
        // Predicated region
        $region49: #{tpu_custom_call.1} parent=39 // pred_check
          %p255 = pneg %p119
        $region50: #{tpu_custom_call.1} parent=39 // pred_check_branch
          %257 = sbr.rel (%p255) target = $region52
        $region51: #{tpu_custom_call.1} parent=39 // pred_region
          %258 = dma.done [#allocation6], 512
        $region52: #{tpu_custom_call.1} parent=39 // pred_fallthru
          _
        %s259 = sand.u32 %s43, 1
        %s260 = scalar_lea.sflag [#allocation3], %s259
        %s261 = sand.u32 %s43, 1
        %s262 = smul.addr %s261, 8
        %s263 = scalar_lea.vmem [#allocation2], %s262
        %p264 = pneg %p56
        %p265 = pneg %p53
        %p266 = pneg %p77
        %p267 = pneg %p74
        %p268 = pneg %p98
        %p269 = pneg %p95
        %p270 = pneg %p119
        %p271 = pneg %p116
        %p272 = pneg %p140
        %p273 = pneg %p137
        %p274 = pneg %p166
        %p275 = pneg %p163
        %s276 = sand.u32 %s153, 1
        %s277 = scalar_lea.sflag [#allocation4], %s276
        %s278 = sand.u32 %s153, 1
        %s279 = smul.addr %s278, 8
        %s280 = scalar_lea.vmem [#allocation8], %s279
        %p281 = scmp.eq.s32.totalorder %s28, 0
        // Predicated region
        $region53: #{tpu_custom_call.1} parent=39 // pred_check
          %p282 = pneg %p281
        $region54: #{tpu_custom_call.1} parent=39 // pred_check_branch
          %284 = sbr.rel (%p282) target = $region56
        $region55: #{tpu_custom_call.1} parent=39 // pred_region
          %v285 = vld [vmem:[%s4] sm:$0x1]
          %v287 = vlaneseq
          %v288 = vshrl.u32 %v287, 7
          %v289 = vsub.s32 0, %v288
          %v290 = vrot.slane %v285, %v289
          %vm292 = vcmask 261120
          %293 = vst.msk [vmem:[%s280] sm:$0xff] %vm292, %v290
        $region56: #{tpu_custom_call.1} parent=39 // pred_fallthru
          _
        %v294 = vld [vmem:[%s246] sm:$0xff]
        %s295 = smul.u32 %s28, 32
        %s296 = scalar_lea.vmem [#allocation5], %s295
        %v297 = vld [vmem:[%s296] sm:$0xff]
        %v298 = vld [vmem:[%s296 + $0x8] sm:$0xff]
        %v299 = vld [vmem:[%s296 + $0x10] sm:$0xff]
        %v300 = vld [vmem:[%s296 + $0x18] sm:$0xff]
        %s301 = scalar_lea.vmem %s2, %s28
        %v302 = vld [vmem:[%s301] sm:$0x1]
        %v304 = vlaneseq
        %v305 = vshrl.u32 %v304, 7
        %v306 = vsub.s32 0, %v305
        %v307 = vrot.slane %v302, %v306
        %vm309 = vcmask 261120
        %v311 = vsel %vm309, %v294, 0
        %313 = vmatprep.subr.mxu0 0.0
        %314 = vmatpush1.msra.mxu0 %v297
        %315 = vmatprep.subr.mxu0 0.0
        %316 = vmatpush1.msra.mxu0 %v298
        %317 = vmatprep.subr.mxu0 0.0
        %318 = vmatpush1.msra.mxu0 %v299
        %319 = vmatprep.subr.mxu0 0.0
        %320 = vmatpush1.msra.mxu0 %v300
        %321 = vmatprep.subr.mxu0 0.0
        %322 = vmatpush1.msra.mxu0 0.0
        %323 = vmatprep.subr.mxu0 0.0
        %324 = vmatpush1.msra.mxu0 0.0
        %325 = vmatprep.subr.mxu0 0.0
        %326 = vmatpush1.msra.mxu0 0.0
        %327 = vmatprep.subr.mxu0 0.0
        %328 = vmatpush1.msra.mxu0 0.0
        %329 = vmatprep.subr.mxu0 0.0
        %330 = vmatpush1.msra.mxu0 0.0
        %331 = vmatprep.subr.mxu0 0.0
        %332 = vmatpush1.msra.mxu0 0.0
        %333 = vmatprep.subr.mxu0 0.0
        %334 = vmatpush1.msra.mxu0 0.0
        %335 = vmatprep.subr.mxu0 0.0
        %336 = vmatpush1.msra.mxu0 0.0
        %337 = vmatprep.subr.mxu0 0.0
        %338 = vmatpush1.msra.mxu0 0.0
        %339 = vmatprep.subr.mxu0 0.0
        %340 = vmatpush1.msra.mxu0 0.0
        %341 = vmatprep.subr.mxu0 0.0
        %342 = vmatpush1.msra.mxu0 0.0
        %343 = vmatprep.subr.mxu0 0.0
        %344 = vmatpush1.msra.mxu0 0.0
        %345 = vmatprep.subr.mxu0 0.0
        %346 = vmatpush1.msra.mxu0 0.0
        %347 = vmatprep.subr.mxu0 0.0
        %348 = vmatpush1.msra.mxu0 0.0
        %349 = vmatprep.subr.mxu0 0.0
        %350 = vmatpush1.msra.mxu0 0.0
        %351 = vmatprep.subr.mxu0 0.0
        %352 = vmatpush1.msra.mxu0 0.0
        %353 = vmatprep.subr.mxu0 0.0
        %354 = vmatpush1.msra.mxu0 0.0
        %355 = vmatprep.subr.mxu0 0.0
        %356 = vmatpush1.msra.mxu0 0.0
        %357 = vmatprep.subr.mxu0 0.0
        %358 = vmatpush1.msra.mxu0 0.0
        %359 = vmatprep.subr.mxu0 0.0
        %360 = vmatpush1.msra.mxu0 0.0
        %361 = vmatprep.subr.mxu0 0.0
        %362 = vmatpush1.msra.mxu0 0.0
        %363 = vmatprep.subr.mxu0 0.0
        %364 = vmatpush1.msra.mxu0 0.0
        %365 = vmatprep.subr.mxu0 0.0
        %366 = vmatpush1.msra.mxu0 0.0
        %367 = vmatprep.subr.mxu0 0.0
        %368 = vmatpush1.msra.mxu0 0.0
        %369 = vmatprep.subr.mxu0 0.0
        %370 = vmatpush1.msra.mxu0 0.0
        %371 = vmatprep.subr.mxu0 0.0
        %372 = vmatpush1.msra.mxu0 0.0
        %373 = vmatprep.subr.mxu0 0.0
        %374 = vmatpush1.msra.mxu0 0.0
        %375 = vmatprep.subr.mxu0 0.0
        %376 = vmatpush1.msra.mxu0 0.0
        %377 = vmatprep.mubr.f32.mxu0 0.0
        %378 = vmatmul.mubr.f32.gmra.mrb[0].mxu0 %v311
        %v379 = vpop.f32.mrb[0].mxu0
        %v380 = vadd.f32 %v307, %v379
        %v381 = vpop.f32.mrb[0].mxu0
        %382 = vdwg.mxu0
        %384 = vrot.lane.b32.xlu0 %v380, 96
        %v385 = vpop.permute.xlu0 %384
        %vm386 = vcmask 64512
        %v387 = vsel %vm386, %v380, 0
        %v389 = vsel %vm386, %v385, 0
        %391 = vmatprep.subr.mxu0 0.0
        %392 = vmatpush1.xpose.msra.mxu0 %v389
        %393 = vmatprep.subr.mxu0 0.0
        %394 = vmatpush1.xpose.msra.mxu0 0.0
        %395 = vmatprep.subr.mxu0 0.0
        %396 = vmatpush1.xpose.msra.mxu0 0.0
        %397 = vmatprep.subr.mxu0 0.0
        %398 = vmatpush1.xpose.msra.mxu0 0.0
        %399 = vmatprep.subr.mxu0 0.0
        %400 = vmatpush1.xpose.msra.mxu0 0.0
        %401 = vmatprep.subr.mxu0 0.0
        %402 = vmatpush1.xpose.msra.mxu0 0.0
        %403 = vmatprep.subr.mxu0 0.0
        %404 = vmatpush1.xpose.msra.mxu0 0.0
        %405 = vmatprep.subr.mxu0 0.0
        %406 = vmatpush1.xpose.msra.mxu0 0.0
        %407 = vmatprep.subr.mxu0 0.0
        %408 = vmatpush1.xpose.msra.mxu0 0.0
        %409 = vmatprep.subr.mxu0 0.0
        %410 = vmatpush1.xpose.msra.mxu0 0.0
        %411 = vmatprep.subr.mxu0 0.0
        %412 = vmatpush1.xpose.msra.mxu0 0.0
        %413 = vmatprep.subr.mxu0 0.0
        %414 = vmatpush1.xpose.msra.mxu0 0.0
        %415 = vmatprep.subr.mxu0 0.0
        %416 = vmatpush1.xpose.msra.mxu0 0.0
        %417 = vmatprep.subr.mxu0 0.0
        %418 = vmatpush1.xpose.msra.mxu0 0.0
        %419 = vmatprep.subr.mxu0 0.0
        %420 = vmatpush1.xpose.msra.mxu0 0.0
        %421 = vmatprep.subr.mxu0 0.0
        %422 = vmatpush1.xpose.msra.mxu0 0.0
        %423 = vmatprep.subr.mxu0 0.0
        %424 = vmatpush1.xpose.msra.mxu0 0.0
        %425 = vmatprep.subr.mxu0 0.0
        %426 = vmatpush1.xpose.msra.mxu0 0.0
        %427 = vmatprep.subr.mxu0 0.0
        %428 = vmatpush1.xpose.msra.mxu0 0.0
        %429 = vmatprep.subr.mxu0 0.0
        %430 = vmatpush1.xpose.msra.mxu0 0.0
        %431 = vmatprep.subr.mxu0 0.0
        %432 = vmatpush1.xpose.msra.mxu0 0.0
        %433 = vmatprep.subr.mxu0 0.0
        %434 = vmatpush1.xpose.msra.mxu0 0.0
        %435 = vmatprep.subr.mxu0 0.0
        %436 = vmatpush1.xpose.msra.mxu0 0.0
        %437 = vmatprep.subr.mxu0 0.0
        %438 = vmatpush1.xpose.msra.mxu0 0.0
        %439 = vmatprep.subr.mxu0 0.0
        %440 = vmatpush1.xpose.msra.mxu0 0.0
        %441 = vmatprep.subr.mxu0 0.0
        %442 = vmatpush1.xpose.msra.mxu0 0.0
        %443 = vmatprep.subr.mxu0 0.0
        %444 = vmatpush1.xpose.msra.mxu0 0.0
        %445 = vmatprep.subr.mxu0 0.0
        %446 = vmatpush1.xpose.msra.mxu0 0.0
        %447 = vmatprep.subr.mxu0 0.0
        %448 = vmatpush1.xpose.msra.mxu0 0.0
        %449 = vmatprep.subr.mxu0 0.0
        %450 = vmatpush1.xpose.msra.mxu0 0.0
        %451 = vmatprep.subr.mxu0 0.0
        %452 = vmatpush1.xpose.msra.mxu0 0.0
        %453 = vmatprep.subr.mxu0 0.0
        %454 = vmatpush1.xpose.msra.mxu0 0.0
        %455 = vmatprep.mubr.f32.mxu0 0.0
        %456 = vmatmul.mubr.f32.gmra.mrb[0].mxu0 %v387
        %v457 = vpop.f32.mrb[0].mxu0
        %v458 = vadd.f32 0.0, %v457
        %v459 = vpop.f32.mrb[0].mxu0
        %460 = vdwg.mxu0
        %v461 = vsel %vm386, %v458, -inf
        %462 = vmax.xlane.f32.xlu0 %v461
        %v463 = vpop.xlane.xlu0 %462
        %v464 = vsub.f32 %v458, %v463
        %v465 = vmul.f32 %v464, 1.442695
        %v466 = vpow.pop %v465
        %v467 = vsel %vm386, %v466, 0.0
        %468 = vadd.xlane.f32.xlu0 %v467
        %v469 = vpop.xlane.xlu0 %468
        %v470 = vrcp.pop %v469
        %471 = vrot.lane.b32.xlu0 %v380, 64
        %v472 = vpop.permute.xlu0 %471
        %v475 = vsel %vm386, %v466, 0
        %477 = vmatprep.subr.mxu0 0.0
        %478 = vmatpush1.msra.mxu0 %v472
        %479 = vmatprep.subr.mxu0 0.0
        %480 = vmatpush1.msra.mxu0 0.0
        %481 = vmatprep.subr.mxu0 0.0
        %482 = vmatpush1.msra.mxu0 0.0
        %483 = vmatprep.subr.mxu0 0.0
        %484 = vmatpush1.msra.mxu0 0.0
        %485 = vmatprep.subr.mxu0 0.0
        %486 = vmatpush1.msra.mxu0 0.0
        %487 = vmatprep.subr.mxu0 0.0
        %488 = vmatpush1.msra.mxu0 0.0
        %489 = vmatprep.subr.mxu0 0.0
        %490 = vmatpush1.msra.mxu0 0.0
        %491 = vmatprep.subr.mxu0 0.0
        %492 = vmatpush1.msra.mxu0 0.0
        %493 = vmatprep.subr.mxu0 0.0
        %494 = vmatpush1.msra.mxu0 0.0
        %495 = vmatprep.subr.mxu0 0.0
        %496 = vmatpush1.msra.mxu0 0.0
        %497 = vmatprep.subr.mxu0 0.0
        %498 = vmatpush1.msra.mxu0 0.0
        %499 = vmatprep.subr.mxu0 0.0
        %500 = vmatpush1.msra.mxu0 0.0
        %501 = vmatprep.subr.mxu0 0.0
        %502 = vmatpush1.msra.mxu0 0.0
        %503 = vmatprep.subr.mxu0 0.0
        %504 = vmatpush1.msra.mxu0 0.0
        %505 = vmatprep.subr.mxu0 0.0
        %506 = vmatpush1.msra.mxu0 0.0
        %507 = vmatprep.subr.mxu0 0.0
        %508 = vmatpush1.msra.mxu0 0.0
        %509 = vmatprep.subr.mxu0 0.0
        %510 = vmatpush1.msra.mxu0 0.0
        %511 = vmatprep.subr.mxu0 0.0
        %512 = vmatpush1.msra.mxu0 0.0
        %513 = vmatprep.subr.mxu0 0.0
        %514 = vmatpush1.msra.mxu0 0.0
        %515 = vmatprep.subr.mxu0 0.0
        %516 = vmatpush1.msra.mxu0 0.0
        %517 = vmatprep.subr.mxu0 0.0
        %518 = vmatpush1.msra.mxu0 0.0
        %519 = vmatprep.subr.mxu0 0.0
        %520 = vmatpush1.msra.mxu0 0.0
        %521 = vmatprep.subr.mxu0 0.0
        %522 = vmatpush1.msra.mxu0 0.0
        %523 = vmatprep.subr.mxu0 0.0
        %524 = vmatpush1.msra.mxu0 0.0
        %525 = vmatprep.subr.mxu0 0.0
        %526 = vmatpush1.msra.mxu0 0.0
        %527 = vmatprep.subr.mxu0 0.0
        %528 = vmatpush1.msra.mxu0 0.0
        %529 = vmatprep.subr.mxu0 0.0
        %530 = vmatpush1.msra.mxu0 0.0
        %531 = vmatprep.subr.mxu0 0.0
        %532 = vmatpush1.msra.mxu0 0.0
        %533 = vmatprep.subr.mxu0 0.0
        %534 = vmatpush1.msra.mxu0 0.0
        %535 = vmatprep.subr.mxu0 0.0
        %536 = vmatpush1.msra.mxu0 0.0
        %537 = vmatprep.subr.mxu0 0.0
        %538 = vmatpush1.msra.mxu0 0.0
        %539 = vmatprep.subr.mxu0 0.0
        %540 = vmatpush1.msra.mxu0 0.0
        %541 = vmatprep.mubr.f32.mxu0 0.0
        %542 = vmatmul.mubr.f32.gmra.mrb[0].mxu0 %v475
        %v543 = vpop.f32.mrb[0].mxu0
        %v544 = vadd.f32 0.0, %v543
        %v545 = vpop.f32.mrb[0].mxu0
        %546 = vdwg.mxu0
        %v547 = vmul.f32 %v544, %v470
        %548 = vrot.lane.b32.xlu0 %v380, 120
        %v549 = vpop.permute.xlu0 %548
        %550 = vrot.lane.b32.xlu0 %v380, 88
        %v551 = vpop.permute.xlu0 %550
        %v552 = vsel %vm386, %v549, 0
        %v554 = vsel %vm386, %v551, 0
        %556 = vmatprep.subr.mxu0 0.0
        %557 = vmatpush1.xpose.msra.mxu0 %v554
        %558 = vmatprep.subr.mxu0 0.0
        %559 = vmatpush1.xpose.msra.mxu0 0.0
        %560 = vmatprep.subr.mxu0 0.0
        %561 = vmatpush1.xpose.msra.mxu0 0.0
        %562 = vmatprep.subr.mxu0 0.0
        %563 = vmatpush1.xpose.msra.mxu0 0.0
        %564 = vmatprep.subr.mxu0 0.0
        %565 = vmatpush1.xpose.msra.mxu0 0.0
        %566 = vmatprep.subr.mxu0 0.0
        %567 = vmatpush1.xpose.msra.mxu0 0.0
        %568 = vmatprep.subr.mxu0 0.0
        %569 = vmatpush1.xpose.msra.mxu0 0.0
        %570 = vmatprep.subr.mxu0 0.0
        %571 = vmatpush1.xpose.msra.mxu0 0.0
        %572 = vmatprep.subr.mxu0 0.0
        %573 = vmatpush1.xpose.msra.mxu0 0.0
        %574 = vmatprep.subr.mxu0 0.0
        %575 = vmatpush1.xpose.msra.mxu0 0.0
        %576 = vmatprep.subr.mxu0 0.0
        %577 = vmatpush1.xpose.msra.mxu0 0.0
        %578 = vmatprep.subr.mxu0 0.0
        %579 = vmatpush1.xpose.msra.mxu0 0.0
        %580 = vmatprep.subr.mxu0 0.0
        %581 = vmatpush1.xpose.msra.mxu0 0.0
        %582 = vmatprep.subr.mxu0 0.0
        %583 = vmatpush1.xpose.msra.mxu0 0.0
        %584 = vmatprep.subr.mxu0 0.0
        %585 = vmatpush1.xpose.msra.mxu0 0.0
        %586 = vmatprep.subr.mxu0 0.0
        %587 = vmatpush1.xpose.msra.mxu0 0.0
        %588 = vmatprep.subr.mxu0 0.0
        %589 = vmatpush1.xpose.msra.mxu0 0.0
        %590 = vmatprep.subr.mxu0 0.0
        %591 = vmatpush1.xpose.msra.mxu0 0.0
        %592 = vmatprep.subr.mxu0 0.0
        %593 = vmatpush1.xpose.msra.mxu0 0.0
        %594 = vmatprep.subr.mxu0 0.0
        %595 = vmatpush1.xpose.msra.mxu0 0.0
        %596 = vmatprep.subr.mxu0 0.0
        %597 = vmatpush1.xpose.msra.mxu0 0.0
        %598 = vmatprep.subr.mxu0 0.0
        %599 = vmatpush1.xpose.msra.mxu0 0.0
        %600 = vmatprep.subr.mxu0 0.0
        %601 = vmatpush1.xpose.msra.mxu0 0.0
        %602 = vmatprep.subr.mxu0 0.0
        %603 = vmatpush1.xpose.msra.mxu0 0.0
        %604 = vmatprep.subr.mxu0 0.0
        %605 = vmatpush1.xpose.msra.mxu0 0.0
        %606 = vmatprep.subr.mxu0 0.0
        %607 = vmatpush1.xpose.msra.mxu0 0.0
        %608 = vmatprep.subr.mxu0 0.0
        %609 = vmatpush1.xpose.msra.mxu0 0.0
        %610 = vmatprep.subr.mxu0 0.0
        %611 = vmatpush1.xpose.msra.mxu0 0.0
        %612 = vmatprep.subr.mxu0 0.0
        %613 = vmatpush1.xpose.msra.mxu0 0.0
        %614 = vmatprep.subr.mxu0 0.0
        %615 = vmatpush1.xpose.msra.mxu0 0.0
        %616 = vmatprep.subr.mxu0 0.0
        %617 = vmatpush1.xpose.msra.mxu0 0.0
        %618 = vmatprep.subr.mxu0 0.0
        %619 = vmatpush1.xpose.msra.mxu0 0.0
        %620 = vmatprep.mubr.f32.mxu0 0.0
        %621 = vmatmul.mubr.f32.gmra.mrb[0].mxu0 %v552
        %v622 = vpop.f32.mrb[0].mxu0
        %v623 = vadd.f32 0.0, %v622
        %v624 = vpop.f32.mrb[0].mxu0
        %625 = vdwg.mxu0
        %v626 = vsel %vm386, %v623, -inf
        %627 = vmax.xlane.f32.xlu0 %v626
        %v628 = vpop.xlane.xlu0 %627
        %v629 = vsub.f32 %v623, %v628
        %v630 = vmul.f32 %v629, 1.442695
        %v631 = vpow.pop %v630
        %v632 = vsel %vm386, %v631, 0.0
        %633 = vadd.xlane.f32.xlu0 %v632
        %v634 = vpop.xlane.xlu0 %633
        %v635 = vrcp.pop %v634
        %636 = vrot.lane.b32.xlu0 %v380, 56
        %v637 = vpop.permute.xlu0 %636
        %v640 = vsel %vm386, %v631, 0
        %642 = vmatprep.subr.mxu0 0.0
        %643 = vmatpush1.msra.mxu0 %v637
        %644 = vmatprep.subr.mxu0 0.0
        %645 = vmatpush1.msra.mxu0 0.0
        %646 = vmatprep.subr.mxu0 0.0
        %647 = vmatpush1.msra.mxu0 0.0
        %648 = vmatprep.subr.mxu0 0.0
        %649 = vmatpush1.msra.mxu0 0.0
        %650 = vmatprep.subr.mxu0 0.0
        %651 = vmatpush1.msra.mxu0 0.0
        %652 = vmatprep.subr.mxu0 0.0
        %653 = vmatpush1.msra.mxu0 0.0
        %654 = vmatprep.subr.mxu0 0.0
        %655 = vmatpush1.msra.mxu0 0.0
        %656 = vmatprep.subr.mxu0 0.0
        %657 = vmatpush1.msra.mxu0 0.0
        %658 = vmatprep.subr.mxu0 0.0
        %659 = vmatpush1.msra.mxu0 0.0
        %660 = vmatprep.subr.mxu0 0.0
        %661 = vmatpush1.msra.mxu0 0.0
        %662 = vmatprep.subr.mxu0 0.0
        %663 = vmatpush1.msra.mxu0 0.0
        %664 = vmatprep.subr.mxu0 0.0
        %665 = vmatpush1.msra.mxu0 0.0
        %666 = vmatprep.subr.mxu0 0.0
        %667 = vmatpush1.msra.mxu0 0.0
        %668 = vmatprep.subr.mxu0 0.0
        %669 = vmatpush1.msra.mxu0 0.0
        %670 = vmatprep.subr.mxu0 0.0
        %671 = vmatpush1.msra.mxu0 0.0
        %672 = vmatprep.subr.mxu0 0.0
        %673 = vmatpush1.msra.mxu0 0.0
        %674 = vmatprep.subr.mxu0 0.0
        %675 = vmatpush1.msra.mxu0 0.0
        %676 = vmatprep.subr.mxu0 0.0
        %677 = vmatpush1.msra.mxu0 0.0
        %678 = vmatprep.subr.mxu0 0.0
        %679 = vmatpush1.msra.mxu0 0.0
        %680 = vmatprep.subr.mxu0 0.0
        %681 = vmatpush1.msra.mxu0 0.0
        %682 = vmatprep.subr.mxu0 0.0
        %683 = vmatpush1.msra.mxu0 0.0
        %684 = vmatprep.subr.mxu0 0.0
        %685 = vmatpush1.msra.mxu0 0.0
        %686 = vmatprep.subr.mxu0 0.0
        %687 = vmatpush1.msra.mxu0 0.0
        %688 = vmatprep.subr.mxu0 0.0
        %689 = vmatpush1.msra.mxu0 0.0
        %690 = vmatprep.subr.mxu0 0.0
        %691 = vmatpush1.msra.mxu0 0.0
        %692 = vmatprep.subr.mxu0 0.0
        %693 = vmatpush1.msra.mxu0 0.0
        %694 = vmatprep.subr.mxu0 0.0
        %695 = vmatpush1.msra.mxu0 0.0
        %696 = vmatprep.subr.mxu0 0.0
        %697 = vmatpush1.msra.mxu0 0.0
        %698 = vmatprep.subr.mxu0 0.0
        %699 = vmatpush1.msra.mxu0 0.0
        %700 = vmatprep.subr.mxu0 0.0
        %701 = vmatpush1.msra.mxu0 0.0
        %702 = vmatprep.subr.mxu0 0.0
        %703 = vmatpush1.msra.mxu0 0.0
        %704 = vmatprep.subr.mxu0 0.0
        %705 = vmatpush1.msra.mxu0 0.0
        %706 = vmatprep.mubr.f32.mxu0 0.0
        %707 = vmatmul.mubr.f32.gmra.mrb[0].mxu0 %v640
        %v708 = vpop.f32.mrb[0].mxu0
        %v709 = vadd.f32 0.0, %v708
        %v710 = vpop.f32.mrb[0].mxu0
        %711 = vdwg.mxu0
        %v712 = vmul.f32 %v709, %v635
        %713 = vrot.lane.b32.xlu0 %v380, 112
        %v714 = vpop.permute.xlu0 %713
        %715 = vrot.lane.b32.xlu0 %v380, 80
        %v716 = vpop.permute.xlu0 %715
        %v717 = vsel %vm386, %v714, 0
        %v719 = vsel %vm386, %v716, 0
        %721 = vmatprep.subr.mxu0 0.0
        %722 = vmatpush1.xpose.msra.mxu0 %v719
        %723 = vmatprep.subr.mxu0 0.0
        %724 = vmatpush1.xpose.msra.mxu0 0.0
        %725 = vmatprep.subr.mxu0 0.0
        %726 = vmatpush1.xpose.msra.mxu0 0.0
        %727 = vmatprep.subr.mxu0 0.0
        %728 = vmatpush1.xpose.msra.mxu0 0.0
        %729 = vmatprep.subr.mxu0 0.0
        %730 = vmatpush1.xpose.msra.mxu0 0.0
        %731 = vmatprep.subr.mxu0 0.0
        %732 = vmatpush1.xpose.msra.mxu0 0.0
        %733 = vmatprep.subr.mxu0 0.0
        %734 = vmatpush1.xpose.msra.mxu0 0.0
        %735 = vmatprep.subr.mxu0 0.0
        %736 = vmatpush1.xpose.msra.mxu0 0.0
        %737 = vmatprep.subr.mxu0 0.0
        %738 = vmatpush1.xpose.msra.mxu0 0.0
        %739 = vmatprep.subr.mxu0 0.0
        %740 = vmatpush1.xpose.msra.mxu0 0.0
        %741 = vmatprep.subr.mxu0 0.0
        %742 = vmatpush1.xpose.msra.mxu0 0.0
        %743 = vmatprep.subr.mxu0 0.0
        %744 = vmatpush1.xpose.msra.mxu0 0.0
        %745 = vmatprep.subr.mxu0 0.0
        %746 = vmatpush1.xpose.msra.mxu0 0.0
        %747 = vmatprep.subr.mxu0 0.0
        %748 = vmatpush1.xpose.msra.mxu0 0.0
        %749 = vmatprep.subr.mxu0 0.0
        %750 = vmatpush1.xpose.msra.mxu0 0.0
        %751 = vmatprep.subr.mxu0 0.0
        %752 = vmatpush1.xpose.msra.mxu0 0.0
        %753 = vmatprep.subr.mxu0 0.0
        %754 = vmatpush1.xpose.msra.mxu0 0.0
        %755 = vmatprep.subr.mxu0 0.0
        %756 = vmatpush1.xpose.msra.mxu0 0.0
        %757 = vmatprep.subr.mxu0 0.0
        %758 = vmatpush1.xpose.msra.mxu0 0.0
        %759 = vmatprep.subr.mxu0 0.0
        %760 = vmatpush1.xpose.msra.mxu0 0.0
        %761 = vmatprep.subr.mxu0 0.0
        %762 = vmatpush1.xpose.msra.mxu0 0.0
        %763 = vmatprep.subr.mxu0 0.0
        %764 = vmatpush1.xpose.msra.mxu0 0.0
        %765 = vmatprep.subr.mxu0 0.0
        %766 = vmatpush1.xpose.msra.mxu0 0.0
        %767 = vmatprep.subr.mxu0 0.0
        %768 = vmatpush1.xpose.msra.mxu0 0.0
        %769 = vmatprep.subr.mxu0 0.0
        %770 = vmatpush1.xpose.msra.mxu0 0.0
        %771 = vmatprep.subr.mxu0 0.0
        %772 = vmatpush1.xpose.msra.mxu0 0.0
        %773 = vmatprep.subr.mxu0 0.0
        %774 = vmatpush1.xpose.msra.mxu0 0.0
        %775 = vmatprep.subr.mxu0 0.0
        %776 = vmatpush1.xpose.msra.mxu0 0.0
        %777 = vmatprep.subr.mxu0 0.0
        %778 = vmatpush1.xpose.msra.mxu0 0.0
        %779 = vmatprep.subr.mxu0 0.0
        %780 = vmatpush1.xpose.msra.mxu0 0.0
        %781 = vmatprep.subr.mxu0 0.0
        %782 = vmatpush1.xpose.msra.mxu0 0.0
        %783 = vmatprep.subr.mxu0 0.0
        %784 = vmatpush1.xpose.msra.mxu0 0.0
        %785 = vmatprep.mubr.f32.mxu0 0.0
        %786 = vmatmul.mubr.f32.gmra.mrb[0].mxu0 %v717
        %v787 = vpop.f32.mrb[0].mxu0
        %v788 = vadd.f32 0.0, %v787
        %v789 = vpop.f32.mrb[0].mxu0
        %790 = vdwg.mxu0
        %v791 = vsel %vm386, %v788, -inf
        %792 = vmax.xlane.f32.xlu0 %v791
        %v793 = vpop.xlane.xlu0 %792
        %v794 = vsub.f32 %v788, %v793
        %v795 = vmul.f32 %v794, 1.442695
        %v796 = vpow.pop %v795
        %v797 = vsel %vm386, %v796, 0.0
        %798 = vadd.xlane.f32.xlu0 %v797
        %v799 = vpop.xlane.xlu0 %798
        %v800 = vrcp.pop %v799
        %801 = vrot.lane.b32.xlu0 %v380, 48
        %v802 = vpop.permute.xlu0 %801
        %v805 = vsel %vm386, %v796, 0
        %807 = vmatprep.subr.mxu0 0.0
        %808 = vmatpush1.msra.mxu0 %v802
        %809 = vmatprep.subr.mxu0 0.0
        %810 = vmatpush1.msra.mxu0 0.0
        %811 = vmatprep.subr.mxu0 0.0
        %812 = vmatpush1.msra.mxu0 0.0
        %813 = vmatprep.subr.mxu0 0.0
        %814 = vmatpush1.msra.mxu0 0.0
        %815 = vmatprep.subr.mxu0 0.0
        %816 = vmatpush1.msra.mxu0 0.0
        %817 = vmatprep.subr.mxu0 0.0
        %818 = vmatpush1.msra.mxu0 0.0
        %819 = vmatprep.subr.mxu0 0.0
        %820 = vmatpush1.msra.mxu0 0.0
        %821 = vmatprep.subr.mxu0 0.0
        %822 = vmatpush1.msra.mxu0 0.0
        %823 = vmatprep.subr.mxu0 0.0
        %824 = vmatpush1.msra.mxu0 0.0
        %825 = vmatprep.subr.mxu0 0.0
        %826 = vmatpush1.msra.mxu0 0.0
        %827 = vmatprep.subr.mxu0 0.0
        %828 = vmatpush1.msra.mxu0 0.0
        %829 = vmatprep.subr.mxu0 0.0
        %830 = vmatpush1.msra.mxu0 0.0
        %831 = vmatprep.subr.mxu0 0.0
        %832 = vmatpush1.msra.mxu0 0.0
        %833 = vmatprep.subr.mxu0 0.0
        %834 = vmatpush1.msra.mxu0 0.0
        %835 = vmatprep.subr.mxu0 0.0
        %836 = vmatpush1.msra.mxu0 0.0
        %837 = vmatprep.subr.mxu0 0.0
        %838 = vmatpush1.msra.mxu0 0.0
        %839 = vmatprep.subr.mxu0 0.0
        %840 = vmatpush1.msra.mxu0 0.0
        %841 = vmatprep.subr.mxu0 0.0
        %842 = vmatpush1.msra.mxu0 0.0
        %843 = vmatprep.subr.mxu0 0.0
        %844 = vmatpush1.msra.mxu0 0.0
        %845 = vmatprep.subr.mxu0 0.0
        %846 = vmatpush1.msra.mxu0 0.0
        %847 = vmatprep.subr.mxu0 0.0
        %848 = vmatpush1.msra.mxu0 0.0
        %849 = vmatprep.subr.mxu0 0.0
        %850 = vmatpush1.msra.mxu0 0.0
        %851 = vmatprep.subr.mxu0 0.0
        %852 = vmatpush1.msra.mxu0 0.0
        %853 = vmatprep.subr.mxu0 0.0
        %854 = vmatpush1.msra.mxu0 0.0
        %855 = vmatprep.subr.mxu0 0.0
        %856 = vmatpush1.msra.mxu0 0.0
        %857 = vmatprep.subr.mxu0 0.0
        %858 = vmatpush1.msra.mxu0 0.0
        %859 = vmatprep.subr.mxu0 0.0
        %860 = vmatpush1.msra.mxu0 0.0
        %861 = vmatprep.subr.mxu0 0.0
        %862 = vmatpush1.msra.mxu0 0.0
        %863 = vmatprep.subr.mxu0 0.0
        %864 = vmatpush1.msra.mxu0 0.0
        %865 = vmatprep.subr.mxu0 0.0
        %866 = vmatpush1.msra.mxu0 0.0
        %867 = vmatprep.subr.mxu0 0.0
        %868 = vmatpush1.msra.mxu0 0.0
        %869 = vmatprep.subr.mxu0 0.0
        %870 = vmatpush1.msra.mxu0 0.0
        %871 = vmatprep.mubr.f32.mxu0 0.0
        %872 = vmatmul.mubr.f32.gmra.mrb[0].mxu0 %v805
        %v873 = vpop.f32.mrb[0].mxu0
        %v874 = vadd.f32 0.0, %v873
        %v875 = vpop.f32.mrb[0].mxu0
        %876 = vdwg.mxu0
        %v877 = vmul.f32 %v874, %v800
        %878 = vrot.lane.b32.xlu0 %v380, 104
        %v879 = vpop.permute.xlu0 %878
        %880 = vrot.lane.b32.xlu0 %v380, 72
        %v881 = vpop.permute.xlu0 %880
        %v882 = vsel %vm386, %v879, 0
        %v884 = vsel %vm386, %v881, 0
        %886 = vmatprep.subr.mxu0 0.0
        %887 = vmatpush1.xpose.msra.mxu0 %v884
        %888 = vmatprep.subr.mxu0 0.0
        %889 = vmatpush1.xpose.msra.mxu0 0.0
        %890 = vmatprep.subr.mxu0 0.0
        %891 = vmatpush1.xpose.msra.mxu0 0.0
        %892 = vmatprep.subr.mxu0 0.0
        %893 = vmatpush1.xpose.msra.mxu0 0.0
        %894 = vmatprep.subr.mxu0 0.0
        %895 = vmatpush1.xpose.msra.mxu0 0.0
        %896 = vmatprep.subr.mxu0 0.0
        %897 = vmatpush1.xpose.msra.mxu0 0.0
        %898 = vmatprep.subr.mxu0 0.0
        %899 = vmatpush1.xpose.msra.mxu0 0.0
        %900 = vmatprep.subr.mxu0 0.0
        %901 = vmatpush1.xpose.msra.mxu0 0.0
        %902 = vmatprep.subr.mxu0 0.0
        %903 = vmatpush1.xpose.msra.mxu0 0.0
        %904 = vmatprep.subr.mxu0 0.0
        %905 = vmatpush1.xpose.msra.mxu0 0.0
        %906 = vmatprep.subr.mxu0 0.0
        %907 = vmatpush1.xpose.msra.mxu0 0.0
        %908 = vmatprep.subr.mxu0 0.0
        %909 = vmatpush1.xpose.msra.mxu0 0.0
        %910 = vmatprep.subr.mxu0 0.0
        %911 = vmatpush1.xpose.msra.mxu0 0.0
        %912 = vmatprep.subr.mxu0 0.0
        %913 = vmatpush1.xpose.msra.mxu0 0.0
        %914 = vmatprep.subr.mxu0 0.0
        %915 = vmatpush1.xpose.msra.mxu0 0.0
        %916 = vmatprep.subr.mxu0 0.0
        %917 = vmatpush1.xpose.msra.mxu0 0.0
        %918 = vmatprep.subr.mxu0 0.0
        %919 = vmatpush1.xpose.msra.mxu0 0.0
        %920 = vmatprep.subr.mxu0 0.0
        %921 = vmatpush1.xpose.msra.mxu0 0.0
        %922 = vmatprep.subr.mxu0 0.0
        %923 = vmatpush1.xpose.msra.mxu0 0.0
        %924 = vmatprep.subr.mxu0 0.0
        %925 = vmatpush1.xpose.msra.mxu0 0.0
        %926 = vmatprep.subr.mxu0 0.0
        %927 = vmatpush1.xpose.msra.mxu0 0.0
        %928 = vmatprep.subr.mxu0 0.0
        %929 = vmatpush1.xpose.msra.mxu0 0.0
        %930 = vmatprep.subr.mxu0 0.0
        %931 = vmatpush1.xpose.msra.mxu0 0.0
        %932 = vmatprep.subr.mxu0 0.0
        %933 = vmatpush1.xpose.msra.mxu0 0.0
        %934 = vmatprep.subr.mxu0 0.0
        %935 = vmatpush1.xpose.msra.mxu0 0.0
        %936 = vmatprep.subr.mxu0 0.0
        %937 = vmatpush1.xpose.msra.mxu0 0.0
        %938 = vmatprep.subr.mxu0 0.0
        %939 = vmatpush1.xpose.msra.mxu0 0.0
        %940 = vmatprep.subr.mxu0 0.0
        %941 = vmatpush1.xpose.msra.mxu0 0.0
        %942 = vmatprep.subr.mxu0 0.0
        %943 = vmatpush1.xpose.msra.mxu0 0.0
        %944 = vmatprep.subr.mxu0 0.0
        %945 = vmatpush1.xpose.msra.mxu0 0.0
        %946 = vmatprep.subr.mxu0 0.0
        %947 = vmatpush1.xpose.msra.mxu0 0.0
        %948 = vmatprep.subr.mxu0 0.0
        %949 = vmatpush1.xpose.msra.mxu0 0.0
        %950 = vmatprep.mubr.f32.mxu0 0.0
        %951 = vmatmul.mubr.f32.gmra.mrb[0].mxu0 %v882
        %v952 = vpop.f32.mrb[0].mxu0
        %v953 = vadd.f32 0.0, %v952
        %v954 = vpop.f32.mrb[0].mxu0
        %955 = vdwg.mxu0
        %v956 = vsel %vm386, %v953, -inf
        %957 = vmax.xlane.f32.xlu0 %v956
        %v958 = vpop.xlane.xlu0 %957
        %v959 = vsub.f32 %v953, %v958
        %v960 = vmul.f32 %v959, 1.442695
        %v961 = vpow.pop %v960
        %v962 = vsel %vm386, %v961, 0.0
        %963 = vadd.xlane.f32.xlu0 %v962
        %v964 = vpop.xlane.xlu0 %963
        %v965 = vrcp.pop %v964
        %966 = vrot.lane.b32.xlu0 %v380, 40
        %v967 = vpop.permute.xlu0 %966
        %v970 = vsel %vm386, %v961, 0
        %972 = vmatprep.subr.mxu0 0.0
        %973 = vmatpush1.msra.mxu0 %v967
        %974 = vmatprep.subr.mxu0 0.0
        %975 = vmatpush1.msra.mxu0 0.0
        %976 = vmatprep.subr.mxu0 0.0
        %977 = vmatpush1.msra.mxu0 0.0
        %978 = vmatprep.subr.mxu0 0.0
        %979 = vmatpush1.msra.mxu0 0.0
        %980 = vmatprep.subr.mxu0 0.0
        %981 = vmatpush1.msra.mxu0 0.0
        %982 = vmatprep.subr.mxu0 0.0
        %983 = vmatpush1.msra.mxu0 0.0
        %984 = vmatprep.subr.mxu0 0.0
        %985 = vmatpush1.msra.mxu0 0.0
        %986 = vmatprep.subr.mxu0 0.0
        %987 = vmatpush1.msra.mxu0 0.0
        %988 = vmatprep.subr.mxu0 0.0
        %989 = vmatpush1.msra.mxu0 0.0
        %990 = vmatprep.subr.mxu0 0.0
        %991 = vmatpush1.msra.mxu0 0.0
        %992 = vmatprep.subr.mxu0 0.0
        %993 = vmatpush1.msra.mxu0 0.0
        %994 = vmatprep.subr.mxu0 0.0
        %995 = vmatpush1.msra.mxu0 0.0
        %996 = vmatprep.subr.mxu0 0.0
        %997 = vmatpush1.msra.mxu0 0.0
        %998 = vmatprep.subr.mxu0 0.0
        %999 = vmatpush1.msra.mxu0 0.0
        %1000 = vmatprep.subr.mxu0 0.0
        %1001 = vmatpush1.msra.mxu0 0.0
        %1002 = vmatprep.subr.mxu0 0.0
        %1003 = vmatpush1.msra.mxu0 0.0
        %1004 = vmatprep.subr.mxu0 0.0
        %1005 = vmatpush1.msra.mxu0 0.0
        %1006 = vmatprep.subr.mxu0 0.0
        %1007 = vmatpush1.msra.mxu0 0.0
        %1008 = vmatprep.subr.mxu0 0.0
        %1009 = vmatpush1.msra.mxu0 0.0
        %1010 = vmatprep.subr.mxu0 0.0
        %1011 = vmatpush1.msra.mxu0 0.0
        %1012 = vmatprep.subr.mxu0 0.0
        %1013 = vmatpush1.msra.mxu0 0.0
        %1014 = vmatprep.subr.mxu0 0.0
        %1015 = vmatpush1.msra.mxu0 0.0
        %1016 = vmatprep.subr.mxu0 0.0
        %1017 = vmatpush1.msra.mxu0 0.0
        %1018 = vmatprep.subr.mxu0 0.0
        %1019 = vmatpush1.msra.mxu0 0.0
        %1020 = vmatprep.subr.mxu0 0.0
        %1021 = vmatpush1.msra.mxu0 0.0
        %1022 = vmatprep.subr.mxu0 0.0
        %1023 = vmatpush1.msra.mxu0 0.0
        %1024 = vmatprep.subr.mxu0 0.0
        %1025 = vmatpush1.msra.mxu0 0.0
        %1026 = vmatprep.subr.mxu0 0.0
        %1027 = vmatpush1.msra.mxu0 0.0
        %1028 = vmatprep.subr.mxu0 0.0
        %1029 = vmatpush1.msra.mxu0 0.0
        %1030 = vmatprep.subr.mxu0 0.0
        %1031 = vmatpush1.msra.mxu0 0.0
        %1032 = vmatprep.subr.mxu0 0.0
        %1033 = vmatpush1.msra.mxu0 0.0
        %1034 = vmatprep.subr.mxu0 0.0
        %1035 = vmatpush1.msra.mxu0 0.0
        %1036 = vmatprep.mubr.f32.mxu0 0.0
        %1037 = vmatmul.mubr.f32.gmra.mrb[0].mxu0 %v970
        %v1038 = vpop.f32.mrb[0].mxu0
        %v1039 = vadd.f32 0.0, %v1038
        %v1040 = vpop.f32.mrb[0].mxu0
        %1041 = vdwg.mxu0
        %v1042 = vmul.f32 %v1039, %v965
        %1044 = vrot.lane.b32.xlu0 %v712, 8
        %v1045 = vpop.permute.xlu0 %1044
        %1048 = vrot.lane.b32.xlu0 %v877, 16
        %v1049 = vpop.permute.xlu0 %1048
        %1052 = vrot.lane.b32.xlu0 %v1042, 24
        %v1053 = vpop.permute.xlu0 %1052
        %v1055 = vsel %vm386, %v547, %v1045
        %vm1056 = vcmask 130048
        %v1057 = vsel %vm1056, %v1055, %v1049
        %vm1058 = vcmask 195584
        %v1059 = vsel %vm1058, %v1057, %v1053
        %v1060 = vld [vmem:[%s280] sm:$0xff]
        %s1061 = scalar_lea.vmem [#allocation7], %s295
        %v1062 = vld [vmem:[%s1061] sm:$0xff]
        %v1063 = vld [vmem:[%s1061 + $0x8] sm:$0xff]
        %v1064 = vld [vmem:[%s1061 + $0x10] sm:$0xff]
        %v1065 = vld [vmem:[%s1061 + $0x18] sm:$0xff]
        %v1067 = vsel %vm309, %v1059, 0
        %1069 = vmatprep.subr.mxu0 0.0
        %1070 = vmatpush1.msra.mxu0 %v1062
        %1071 = vmatprep.subr.mxu0 0.0
        %1072 = vmatpush1.msra.mxu0 %v1063
        %1073 = vmatprep.subr.mxu0 0.0
        %1074 = vmatpush1.msra.mxu0 %v1064
        %1075 = vmatprep.subr.mxu0 0.0
        %1076 = vmatpush1.msra.mxu0 %v1065
        %1077 = vmatprep.subr.mxu0 0.0
        %1078 = vmatpush1.msra.mxu0 0.0
        %1079 = vmatprep.subr.mxu0 0.0
        %1080 = vmatpush1.msra.mxu0 0.0
        %1081 = vmatprep.subr.mxu0 0.0
        %1082 = vmatpush1.msra.mxu0 0.0
        %1083 = vmatprep.subr.mxu0 0.0
        %1084 = vmatpush1.msra.mxu0 0.0
        %1085 = vmatprep.subr.mxu0 0.0
        %1086 = vmatpush1.msra.mxu0 0.0
        %1087 = vmatprep.subr.mxu0 0.0
        %1088 = vmatpush1.msra.mxu0 0.0
        %1089 = vmatprep.subr.mxu0 0.0
        %1090 = vmatpush1.msra.mxu0 0.0
        %1091 = vmatprep.subr.mxu0 0.0
        %1092 = vmatpush1.msra.mxu0 0.0
        %1093 = vmatprep.subr.mxu0 0.0
        %1094 = vmatpush1.msra.mxu0 0.0
        %1095 = vmatprep.subr.mxu0 0.0
        %1096 = vmatpush1.msra.mxu0 0.0
        %1097 = vmatprep.subr.mxu0 0.0
        %1098 = vmatpush1.msra.mxu0 0.0
        %1099 = vmatprep.subr.mxu0 0.0
        %1100 = vmatpush1.msra.mxu0 0.0
        %1101 = vmatprep.subr.mxu0 0.0
        %1102 = vmatpush1.msra.mxu0 0.0
        %1103 = vmatprep.subr.mxu0 0.0
        %1104 = vmatpush1.msra.mxu0 0.0
        %1105 = vmatprep.subr.mxu0 0.0
        %1106 = vmatpush1.msra.mxu0 0.0
        %1107 = vmatprep.subr.mxu0 0.0
        %1108 = vmatpush1.msra.mxu0 0.0
        %1109 = vmatprep.subr.mxu0 0.0
        %1110 = vmatpush1.msra.mxu0 0.0
        %1111 = vmatprep.subr.mxu0 0.0
        %1112 = vmatpush1.msra.mxu0 0.0
        %1113 = vmatprep.subr.mxu0 0.0
        %1114 = vmatpush1.msra.mxu0 0.0
        %1115 = vmatprep.subr.mxu0 0.0
        %1116 = vmatpush1.msra.mxu0 0.0
        %1117 = vmatprep.subr.mxu0 0.0
        %1118 = vmatpush1.msra.mxu0 0.0
        %1119 = vmatprep.subr.mxu0 0.0
        %1120 = vmatpush1.msra.mxu0 0.0
        %1121 = vmatprep.subr.mxu0 0.0
        %1122 = vmatpush1.msra.mxu0 0.0
        %1123 = vmatprep.subr.mxu0 0.0
        %1124 = vmatpush1.msra.mxu0 0.0
        %1125 = vmatprep.subr.mxu0 0.0
        %1126 = vmatpush1.msra.mxu0 0.0
        %1127 = vmatprep.subr.mxu0 0.0
        %1128 = vmatpush1.msra.mxu0 0.0
        %1129 = vmatprep.subr.mxu0 0.0
        %1130 = vmatpush1.msra.mxu0 0.0
        %1131 = vmatprep.subr.mxu0 0.0
        %1132 = vmatpush1.msra.mxu0 0.0
        %1133 = vmatprep.mubr.f32.mxu0 0.0
        %1134 = vmatmul.mubr.f32.gmra.mrb[0].mxu0 %v1067
        %v1135 = vpop.f32.mrb[0].mxu0
        %v1136 = vadd.f32 0.0, %v1135
        %v1137 = vpop.f32.mrb[0].mxu0
        %1138 = vdwg.mxu0
        %v1139 = vadd.f32 %v1060, %v1136
        %1140 = vst.msk [vmem:[%s280] sm:$0xff] %vm309, %v1139
        %s1141 = sand.u32 %s153, 1
        %s1142 = scalar_lea.sflag [#allocation4], %s1141
        %s1143 = sand.u32 %s153, 1
        %s1144 = smul.addr %s1143, 8
        %s1145 = scalar_lea.vmem [#allocation8], %s1144
        // Predicated region
        $region57: #{tpu_custom_call.1} parent=39 // pred_check
          %p1146 = pneg %p163
        $region58: #{tpu_custom_call.1} parent=39 // pred_check_branch
          %1148 = sbr.rel (%p1146) target = $region60
        $region59: #{tpu_custom_call.1} parent=39 // pred_region
          %s1150 = ssub.s32 128, 128
          %1151 = vsyncadd %s1142, %s1150
          %s1152 = smul.addr %s27, 128
          %s1153 = scalar_lea.hbm %s5, %s1152
          %s1155 = sshll.u32 %s1145, 4
          %s1156 = int_to_ptr.vmem [resolvable:$true] %s1155
          %1158 = dma.vmem_to_hbm [thread:$0]  %s1156, 128, %s1153, %s1142
        $region60: #{tpu_custom_call.1} parent=39 // pred_fallthru
          _
      $region40: #{tpu_custom_call.1} parent=5 // pred_fallthru
        _
      %p1159 = scmp.le.s32.totalorder 2, %s18
      // Predicated region
      $region61: #{tpu_custom_call.1} parent=5 // pred_check
        %p1160 = pneg %p1159
      $region62: #{tpu_custom_call.1} parent=5 // pred_check_branch
        %1162 = sbr.rel (%p1160) target = $region64
      $region63: #{tpu_custom_call.1} parent=5 // pred_region
        %s1163 = ssub.s32 %s18, 2
        // Predicated region
        $region65: #{tpu_custom_call.1} parent=63 // pred_check
          %p1164 = pneg %p169
        $region66: #{tpu_custom_call.1} parent=63 // pred_check_branch
          %1166 = sbr.rel (%p1164) target = $region68
        $region67: #{tpu_custom_call.1} parent=63 // pred_region
          %s1167 = sand.u32 %s154, 1
          %s1168 = scalar_lea.sflag [#allocation4], %s1167
          %s1169 = sand.u32 %s154, 1
          %s1170 = smul.addr %s1169, 8
          %s1171 = scalar_lea.vmem [#allocation8], %s1170
          %1172 = dma.done %s1168, 128
        $region68: #{tpu_custom_call.1} parent=63 // pred_fallthru
          _
      $region64: #{tpu_custom_call.1} parent=5 // pred_fallthru
        _
    $region6: #{tpu_custom_call.1} parent=1 // loop_footer
      %s22 = sadd.s32 1, %s18
    $region7: #{tpu_custom_call.1} parent=1 // loop_footer_branch
      %17 = sbr.rel target = $region3
    $region8: #{tpu_custom_call.1} parent=1 // loop_exit
      _
    %1173 = vsyncpa [#allocation3], 1
    %s1174 = scalar_lea.sflag [#allocation3], 1
    %1175 = vsyncpa %s1174, 1
    %1176 = vsyncpa [#allocation6], 1
    %1177 = vsyncpa [#allocation4], 1
    %s1178 = scalar_lea.sflag [#allocation4], 1
    %1179 = vsyncpa %s1178, 1

</llo_original>
